<compile_context>
chip_gen: v7x
topology: tpu7x:2x2x1
jax: 0.10.0
libtpu: 0.0.40
codegen_flags: <defaults>
</compile_context>

<pallas_src>
import jax
import jax.numpy as jnp
from jax import lax
from jax.experimental import pallas as pl
from jax.experimental.pallas import tpu as pltpu

STATE_DIM = 3       # Pendulum-v1 observation dim
HIDDEN_DIM = 120    # hidden_dim = [120]
ACTION_DIM = 1      # Pendulum-v1 action dim
ACTION_BOUND = 2.0

PAD = 128           # lane-dense padded hidden / output width

# Packed parameter slab layout (rows, all 8-row aligned so kernel slices are
# sublane-aligned):
#   rows [0, 8)    : w1 padded   (rows 0..STATE_DIM-1 used, cols 0..HIDDEN_DIM-1)
#   rows [8, 16)   : row 8 = b1 padded, rest zero
#   rows [16, 144) : fused head weights (128 x 128); col 0 = wmu, col 1 = wstd
#   rows [144,152) : row 144 = fused head bias; col 0 = bmu, col 1 = bstd
ROW_W1 = 0
ROW_B1 = 8
ROW_WH = 16
ROW_BH = ROW_WH + PAD        # 144
SLAB_ROWS = ROW_BH + 8       # 152


def _policy_kernel(x_ref, p_ref, out_ref):
    # x: (B, STATE_DIM), p: (SLAB_ROWS, PAD), out: (B, PAD)

    # ---- hidden layer on the VPU (K = 3 rank update, no MXU fill/drain) ----
    h = p_ref[ROW_B1:ROW_B1 + 1, :]                       # (1, PAD) bias, broadcasts
    for i in range(STATE_DIM):                            # static unroll
        h = h + x_ref[:, i:i + 1] * p_ref[ROW_W1 + i:ROW_W1 + i + 1, :]
    h = jnp.maximum(h, 0.0)                               # (B, PAD); cols >=120 are 0

    # ---- fused mu/std heads: one (B,128) x (128,128) MXU matmul ----
    w_heads = p_ref[ROW_WH:ROW_WH + PAD, :]               # (PAD, PAD)
    b_heads = p_ref[ROW_BH:ROW_BH + 1, :]                 # (1, PAD)
    heads = jnp.dot(h, w_heads, preferred_element_type=jnp.float32) + b_heads

    # ---- activations (applied full-width; selected per lane) ----
    mu_full = ACTION_BOUND * jnp.tanh(heads)
    # stable single-exp softplus: max(x,0) + log1p(exp(-|x|))
    std_full = jnp.maximum(heads, 0.0) + jnp.log1p(jnp.exp(-jnp.abs(heads)))

    lane = lax.broadcasted_iota(jnp.int32, heads.shape, 1)
    out_ref[...] = jnp.where(
        lane < ACTION_DIM, mu_full,
        jnp.where(lane < 2 * ACTION_DIM, std_full, 0.0))


def pack_params(w1, b1, wmu, bmu, wstd, bstd):
    """Pack all parameters into a single (SLAB_ROWS, PAD) f32 slab."""
    slab = jnp.zeros((SLAB_ROWS, PAD), jnp.float32)
    slab = slab.at[ROW_W1:ROW_W1 + STATE_DIM, 0:HIDDEN_DIM].set(w1)
    slab = slab.at[ROW_B1, 0:HIDDEN_DIM].set(b1.reshape(-1))
    slab = slab.at[ROW_WH:ROW_WH + HIDDEN_DIM, 0:ACTION_DIM].set(wmu)
    slab = slab.at[ROW_WH:ROW_WH + HIDDEN_DIM, ACTION_DIM:2 * ACTION_DIM].set(wstd)
    slab = slab.at[ROW_BH, 0:ACTION_DIM].set(bmu.reshape(-1))
    slab = slab.at[ROW_BH, ACTION_DIM:2 * ACTION_DIM].set(bstd.reshape(-1))
    return slab


def policy_net_continuous(x, w1, b1, wmu, bmu, wstd, bstd):
    B = x.shape[0]
    params = pack_params(w1, b1, wmu, bmu, wstd, bstd)

    vmem_spec = lambda shp: pl.BlockSpec(shp, lambda i: (0,) * len(shp),
                                         memory_space=pltpu.VMEM)

    out = pl.pallas_call(
        _policy_kernel,
        grid=(1,),
        in_specs=[
            vmem_spec(x.shape),               # (B, STATE_DIM)
            vmem_spec(params.shape),          # (SLAB_ROWS, PAD)
        ],
        out_specs=vmem_spec((B, PAD)),        # lane-dense packed (mu | std | 0...)
        out_shape=jax.ShapeDtypeStruct((B, PAD), jnp.float32),
        compiler_params=pltpu.CompilerParams(
            dimension_semantics=("arbitrary",)),
    )(x, params)

    mu = out[:, 0:ACTION_DIM]
    std = out[:, ACTION_DIM:2 * ACTION_DIM]
    return mu, std


def _reference(x, w1, b1, wmu, bmu, wstd, bstd):
    h = jnp.maximum(x @ w1 + b1, 0.0)
    mu = ACTION_BOUND * jnp.tanh(h @ wmu + bmu)
    std = jax.nn.softplus(h @ wstd + bstd)
    return mu, std


if __name__ == "__main__":
    key = jax.random.PRNGKey(0)
    k_x, k_w1, k_b1, k_wmu, k_bmu, k_wstd, k_bstd = jax.random.split(key, 7)

    B = 8  # small rollout batch
    x = jax.random.normal(k_x, (B, STATE_DIM), dtype=jnp.float32)

    # Deterministic synthetic parameters (shapes match the nn.Linear layers,
    # stored as (in_features, out_features)).
    def linear_init(kw, kb, fan_in, fan_out):
        bound = 1.0 / jnp.sqrt(jnp.float32(fan_in))
        w = jax.random.uniform(kw, (fan_in, fan_out), jnp.float32, -bound, bound)
        b = jax.random.uniform(kb, (1, fan_out), jnp.float32, -bound, bound)
        return w, b

    w1, b1 = linear_init(k_w1, k_b1, STATE_DIM, HIDDEN_DIM)
    wmu, bmu = linear_init(k_wmu, k_bmu, HIDDEN_DIM, ACTION_DIM)
    wstd, bstd = linear_init(k_wstd, k_bstd, HIDDEN_DIM, ACTION_DIM)

    mu, std = policy_net_continuous(x, w1, b1, wmu, bmu, wstd, bstd)
    jax.block_until_ready((mu, std))

    mu_ref, std_ref = _reference(x, w1, b1, wmu, bmu, wstd, bstd)
    assert mu.shape == (B, ACTION_DIM) and std.shape == (B, ACTION_DIM)
    assert jnp.allclose(mu, mu_ref, atol=1e-5), "mu mismatch"
    assert jnp.allclose(std, std_ref, atol=1e-5), "std mismatch"

    print("KERNEL_OK")
</pallas_src>

<mosaic_0001>
module attributes {stable_mosaic.version = 11 : i64} {
  func.func @_policy_kernel(%arg0: i32, %arg1: memref<8x3xf32, #tpu.memory_space<vmem>>, %arg2: memref<152x128xf32, #tpu.memory_space<vmem>>, %arg3: memref<8x128xf32, #tpu.memory_space<vmem>>) attributes {dimension_semantics = [#tpu.dimension_semantics<arbitrary>], iteration_bounds = array<i64: 1>, scalar_prefetch = 0 : i64, scratch_operands = 0 : i64, tpu.core_type = #tpu.core_type<tc>, window_params = [{pipeline_mode = #tpu.pipeline_mode<synchronous>, transform_indices = @transform_0, window_bounds = array<i64: 8, 3>}, {pipeline_mode = #tpu.pipeline_mode<synchronous>, transform_indices = @transform_1, window_bounds = array<i64: 152, 128>}, {pipeline_mode = #tpu.pipeline_mode<synchronous>, transform_indices = @transform_2, window_bounds = array<i64: 8, 128>}]} {
    %c8 = arith.constant 8 : index
    %c0 = arith.constant 0 : index
    %0 = vector.load %arg2[%c8, %c0] : memref<152x128xf32, #tpu.memory_space<vmem>>, vector<1x128xf32>
    %c0_0 = arith.constant 0 : index
    %c0_1 = arith.constant 0 : index
    %1 = vector.load %arg1[%c0_0, %c0_1] : memref<8x3xf32, #tpu.memory_space<vmem>>, vector<8x1xf32>
    %c0_2 = arith.constant 0 : index
    %c0_3 = arith.constant 0 : index
    %2 = vector.load %arg2[%c0_2, %c0_3] : memref<152x128xf32, #tpu.memory_space<vmem>>, vector<1x128xf32>
    %3 = vector.broadcast %1 : vector<8x1xf32> to vector<8x128xf32>
    %4 = vector.broadcast %2 : vector<1x128xf32> to vector<8x128xf32>
    %5 = arith.mulf %3, %4 : vector<8x128xf32>
    %6 = vector.broadcast %0 : vector<1x128xf32> to vector<8x128xf32>
    %7 = arith.addf %6, %5 : vector<8x128xf32>
    %c0_4 = arith.constant 0 : index
    %c1 = arith.constant 1 : index
    %8 = vector.load %arg1[%c0_4, %c1] : memref<8x3xf32, #tpu.memory_space<vmem>>, vector<8x1xf32>
    %c1_5 = arith.constant 1 : index
    %c0_6 = arith.constant 0 : index
    %9 = vector.load %arg2[%c1_5, %c0_6] : memref<152x128xf32, #tpu.memory_space<vmem>>, vector<1x128xf32>
    %10 = vector.broadcast %8 : vector<8x1xf32> to vector<8x128xf32>
    %11 = vector.broadcast %9 : vector<1x128xf32> to vector<8x128xf32>
    %12 = arith.mulf %10, %11 : vector<8x128xf32>
    %13 = arith.addf %7, %12 : vector<8x128xf32>
    %c0_7 = arith.constant 0 : index
    %c2 = arith.constant 2 : index
    %14 = vector.load %arg1[%c0_7, %c2] : memref<8x3xf32, #tpu.memory_space<vmem>>, vector<8x1xf32>
    %c2_8 = arith.constant 2 : index
    %c0_9 = arith.constant 0 : index
    %15 = vector.load %arg2[%c2_8, %c0_9] : memref<152x128xf32, #tpu.memory_space<vmem>>, vector<1x128xf32>
    %16 = vector.broadcast %14 : vector<8x1xf32> to vector<8x128xf32>
    %17 = vector.broadcast %15 : vector<1x128xf32> to vector<8x128xf32>
    %18 = arith.mulf %16, %17 : vector<8x128xf32>
    %19 = arith.addf %13, %18 : vector<8x128xf32>
    %cst = arith.constant 0.000000e+00 : f32
    %20 = vector.broadcast %cst : f32 to vector<8x128xf32>
    %21 = arith.maximumf %19, %20 : vector<8x128xf32>
    %c16 = arith.constant 16 : index
    %c0_10 = arith.constant 0 : index
    %22 = vector.load %arg2[%c16, %c0_10] : memref<152x128xf32, #tpu.memory_space<vmem>>, vector<128x128xf32>
    %c144 = arith.constant 144 : index
    %c0_11 = arith.constant 0 : index
    %23 = vector.load %arg2[%c144, %c0_11] : memref<152x128xf32, #tpu.memory_space<vmem>>, vector<1x128xf32>
    %cst_12 = arith.constant dense<0.000000e+00> : vector<8x128xf32>
    %24 = tpu.matmul %21, %22, %cst_12 {dimension_numbers = #tpu.dot_dimension_numbers<[1], [0], [0], [1], [0, 0, 1, 1], [], []>} : vector<8x128xf32>, vector<128x128xf32>, vector<8x128xf32> -> vector<8x128xf32>
    %25 = vector.broadcast %23 : vector<1x128xf32> to vector<8x128xf32>
    %26 = arith.addf %24, %25 : vector<8x128xf32>
    %27 = math.tanh %26 : vector<8x128xf32>
    %cst_13 = arith.constant 2.000000e+00 : f32
    %28 = vector.broadcast %cst_13 : f32 to vector<8x128xf32>
    %29 = arith.mulf %28, %27 : vector<8x128xf32>
    %cst_14 = arith.constant 0.000000e+00 : f32
    %30 = vector.broadcast %cst_14 : f32 to vector<8x128xf32>
    %31 = arith.maximumf %26, %30 : vector<8x128xf32>
    %32 = math.absf %26 : vector<8x128xf32>
    %cst_15 = arith.constant 0.000000e+00 : f32
    %33 = vector.broadcast %cst_15 : f32 to vector<8x128xf32>
    %34 = arith.subf %33, %32 : vector<8x128xf32>
    %35 = math.exp %34 : vector<8x128xf32>
    %36 = math.log1p %35 : vector<8x128xf32>
    %37 = arith.addf %31, %36 : vector<8x128xf32>
    %38 = tpu.iota {dimensions = array<i32: 1>} : vector<8x128xi32>
    %c1_i32 = arith.constant 1 : i32
    %39 = vector.broadcast %c1_i32 : i32 to vector<8x128xi32>
    %40 = arith.cmpi slt, %38, %39 : vector<8x128xi32>
    %c2_i32 = arith.constant 2 : i32
    %41 = vector.broadcast %c2_i32 : i32 to vector<8x128xi32>
    %42 = arith.cmpi slt, %38, %41 : vector<8x128xi32>
    %cst_16 = arith.constant 0.000000e+00 : f32
    %43 = vector.broadcast %cst_16 : f32 to vector<8x128xf32>
    %44 = arith.select %42, %37, %43 : vector<8x128xi1>, vector<8x128xf32>
    %45 = arith.select %40, %29, %44 : vector<8x128xi1>, vector<8x128xf32>
    %c0_17 = arith.constant 0 : index
    %c0_18 = arith.constant 0 : index
    %46 = vector.load %arg3[%c0_17, %c0_18] : memref<8x128xf32, #tpu.memory_space<vmem>>, vector<8x128xf32>
    tpu.vector_store %arg3[%c0_17, %c0_18], %45 {strides = array<i32>} : memref<8x128xf32, #tpu.memory_space<vmem>>, vector<8x128xf32>,
    return
  }
  func.func @transform_0(%arg0: i32) -> (i32, i32) {
    %c0_i32 = arith.constant 0 : i32
    %c0_i32_0 = arith.constant 0 : i32
    %c0_i32_1 = arith.constant 0 : i32
    return %c0_i32, %c0_i32_0 : i32, i32
  }
  func.func @transform_1(%arg0: i32) -> (i32, i32) {
    %c0_i32 = arith.constant 0 : i32
    %c0_i32_0 = arith.constant 0 : i32
    %c0_i32_1 = arith.constant 0 : i32
    return %c0_i32, %c0_i32_0 : i32, i32
  }
  func.func @transform_2(%arg0: i32) -> (i32, i32) {
    %c0_i32 = arith.constant 0 : i32
    %c0_i32_0 = arith.constant 0 : i32
    %c0_i32_1 = arith.constant 0 : i32
    return %c0_i32, %c0_i32_0 : i32, i32
  }
}

</mosaic_0001>

<llo_original>
// kernel: tpu_custom_call.1
$region0: #{tpu_custom_call.1}
  #allocation0 [shape = 'u32[]', space=smem, size = 0x4, offset = 0x4, fixed_abs, tag = 'smem constant byte address 0x4 - core index']
  #allocation1 [shape = 'u32[144,128]{1,0:T(1,128)}', space=vmem, size = 0x12000, scoped, tag = 'internal scratch']
  %s0 = inlined_call_operand.vmem [shape: f32[8,3], index: 0, kind: input, shape index: {}]
  %s1 = inlined_call_operand.hbm [shape: f32[152,128], index: 1, kind: input, shape index: {}]
  %s2 = inlined_call_operand.hbm [shape: f32[8,128], index: 2, kind: output, shape index: {}]
  %s3 = sld [smem:[#allocation0]]
  $region22: #{tpu_custom_call.1} parent=0
    _
  %s5 = ssub.s32 1, %s3
  %s6 = scalar_select 0, %s5, %s3
  $region1: #{tpu_custom_call.1} parent=0
    #allocation2 [shape = 'u8[77824]{0}', space=vmem, size = 0x13000, scoped, tag = 'input window, operand 1, single buffered']
    #allocation3 [shape = 's32[1]{0}', space=sflag, size = 0x4, scoped, tag = 'scoped memory for tpu_custom_call.1']
    #allocation4 [shape = 's32[1]{0}', space=sflag, size = 0x4, scoped, tag = 'scoped memory for tpu_custom_call.1']
    #allocation5 [shape = 'u8[4096]{0}', space=vmem, size = 0x1000, scoped, tag = 'output window, operand 0, single buffered']
    %7 = vsyncpa [#allocation3], 0
    %8 = vsyncpa [#allocation4], 0
    // Predicated region
    $region2: #{tpu_custom_call.1} parent=1 // pred_check
      _
    $region3: #{tpu_custom_call.1} parent=1 // pred_check_branch
      %10 = sbr.rel (0) target = $region5
    $region4: #{tpu_custom_call.1} parent=1 // pred_region
      _
    $region5: #{tpu_custom_call.1} parent=1 // pred_fallthru
      _
    // Predicated region
    $region6: #{tpu_custom_call.1} parent=1 // pred_check
      _
    $region7: #{tpu_custom_call.1} parent=1 // pred_check_branch
      %12 = sbr.rel (0) target = $region9
    $region8: #{tpu_custom_call.1} parent=1 // pred_region
      %s14 = ssub.s32 2432, 2432
      %15 = vsyncadd [#allocation3], %s14
      %s16 = sshll.u32 [#allocation2], 4
      %s17 = int_to_ptr.vmem [resolvable:$true] %s16
      %22 = dma.hbm_to_vmem [thread:$0]  %s1, 2432, %s17, [#allocation3], 128, 128, 8
    $region9: #{tpu_custom_call.1} parent=1 // pred_fallthru
      _
    // Predicated region
    $region10: #{tpu_custom_call.1} parent=1 // pred_check
      _
    $region11: #{tpu_custom_call.1} parent=1 // pred_check_branch
      %24 = sbr.rel (0) target = $region13
    $region12: #{tpu_custom_call.1} parent=1 // pred_region
      %25 = dma.done [#allocation3], 2432
    $region13: #{tpu_custom_call.1} parent=1 // pred_fallthru
      _
    %v26 = vld [vmem:[#allocation2 + $0x8] sm:$0x1]
    %v27 = vld [vmem:[%s0] sm:$0xff]
    %v28 = vld [vmem:[#allocation2] sm:$0x1]
    %30 = vset.pattern.permute.xlu0 0
    %31 = vperm.xlu0 %30, %v27
    %v32 = vpop.permute.xlu0 %31
    %v34 = vlaneseq
    %v35 = vshrl.u32 %v34, 7
    %v36 = vsub.s32 0, %v35
    %v37 = vrot.slane %v28, %v36
    %v38 = vmul.f32 %v32, %v37
    %v39 = vlaneseq
    %v40 = vshrl.u32 %v39, 7
    %v41 = vsub.s32 0, %v40
    %v42 = vrot.slane %v26, %v41
    %v43 = vadd.f32 %v42, %v38
    %v44 = vld [vmem:[#allocation2 + $0x1] sm:$0x1]
    %45 = vset.pattern.permute.xlu0 1
    %46 = vperm.xlu0 %45, %v27
    %v47 = vpop.permute.xlu0 %46
    %v49 = vlaneseq
    %v50 = vshrl.u32 %v49, 7
    %v51 = vsub.s32 0, %v50
    %v52 = vrot.slane %v44, %v51
    %v53 = vmul.f32 %v47, %v52
    %v54 = vadd.f32 %v43, %v53
    %v55 = vld [vmem:[#allocation2 + $0x2] sm:$0x1]
    %56 = vset.pattern.permute.xlu0 2
    %57 = vperm.xlu0 %56, %v27
    %v58 = vpop.permute.xlu0 %57
    %v60 = vlaneseq
    %v61 = vshrl.u32 %v60, 7
    %v62 = vsub.s32 0, %v61
    %v63 = vrot.slane %v55, %v62
    %v64 = vmul.f32 %v58, %v63
    %v65 = vadd.f32 %v54, %v64
    %v66 = vmax.f32 %v65, 0.0
    %v67 = vld [vmem:[#allocation2 + $0x10] sm:$0xff]
    %v68 = vld [vmem:[#allocation2 + $0x18] sm:$0xff]
    %v69 = vld [vmem:[#allocation2 + $0x20] sm:$0xff]
    %v70 = vld [vmem:[#allocation2 + $0x28] sm:$0xff]
    %v71 = vld [vmem:[#allocation2 + $0x30] sm:$0xff]
    %v72 = vld [vmem:[#allocation2 + $0x38] sm:$0xff]
    %v73 = vld [vmem:[#allocation2 + $0x40] sm:$0xff]
    %v74 = vld [vmem:[#allocation2 + $0x48] sm:$0xff]
    %v75 = vld [vmem:[#allocation2 + $0x50] sm:$0xff]
    %v76 = vld [vmem:[#allocation2 + $0x58] sm:$0xff]
    %v77 = vld [vmem:[#allocation2 + $0x60] sm:$0xff]
    %v78 = vld [vmem:[#allocation2 + $0x68] sm:$0xff]
    %v79 = vld [vmem:[#allocation2 + $0x70] sm:$0xff]
    %v80 = vld [vmem:[#allocation2 + $0x78] sm:$0xff]
    %v81 = vld [vmem:[#allocation2 + $0x80] sm:$0xff]
    %v82 = vld [vmem:[#allocation2 + $0x88] sm:$0xff]
    %v83 = vld [vmem:[#allocation2 + $0x90] sm:$0x1]
    %v84 = vlaneseq
    %v85 = vshrl.u32 %v84, 7
    %v86 = vsub.s32 0, %v85
    %v87 = vrot.slane %v83, %v86
    %88 = vmatprep.subr.mxu0 0.0
    %89 = vmatpush1.msra.mxu0 %v67
    %90 = vmatprep.subr.mxu0 0.0
    %91 = vmatpush1.msra.mxu0 %v68
    %92 = vmatprep.subr.mxu0 0.0
    %93 = vmatpush1.msra.mxu0 %v69
    %94 = vmatprep.subr.mxu0 0.0
    %95 = vmatpush1.msra.mxu0 %v70
    %96 = vmatprep.subr.mxu0 0.0
    %97 = vmatpush1.msra.mxu0 %v71
    %98 = vmatprep.subr.mxu0 0.0
    %99 = vmatpush1.msra.mxu0 %v72
    %100 = vmatprep.subr.mxu0 0.0
    %101 = vmatpush1.msra.mxu0 %v73
    %102 = vmatprep.subr.mxu0 0.0
    %103 = vmatpush1.msra.mxu0 %v74
    %104 = vmatprep.subr.mxu0 0.0
    %105 = vmatpush1.msra.mxu0 %v75
    %106 = vmatprep.subr.mxu0 0.0
    %107 = vmatpush1.msra.mxu0 %v76
    %108 = vmatprep.subr.mxu0 0.0
    %109 = vmatpush1.msra.mxu0 %v77
    %110 = vmatprep.subr.mxu0 0.0
    %111 = vmatpush1.msra.mxu0 %v78
    %112 = vmatprep.subr.mxu0 0.0
    %113 = vmatpush1.msra.mxu0 %v79
    %114 = vmatprep.subr.mxu0 0.0
    %115 = vmatpush1.msra.mxu0 %v80
    %116 = vmatprep.subr.mxu0 0.0
    %117 = vmatpush1.msra.mxu0 %v81
    %118 = vmatprep.subr.mxu0 0.0
    %119 = vmatpush1.msra.mxu0 %v82
    %120 = vmatprep.subr.mxu0 0.0
    %121 = vmatpush1.msra.mxu0 0.0
    %122 = vmatprep.subr.mxu0 0.0
    %123 = vmatpush1.msra.mxu0 0.0
    %124 = vmatprep.subr.mxu0 0.0
    %125 = vmatpush1.msra.mxu0 0.0
    %126 = vmatprep.subr.mxu0 0.0
    %127 = vmatpush1.msra.mxu0 0.0
    %128 = vmatprep.subr.mxu0 0.0
    %129 = vmatpush1.msra.mxu0 0.0
    %130 = vmatprep.subr.mxu0 0.0
    %131 = vmatpush1.msra.mxu0 0.0
    %132 = vmatprep.subr.mxu0 0.0
    %133 = vmatpush1.msra.mxu0 0.0
    %134 = vmatprep.subr.mxu0 0.0
    %135 = vmatpush1.msra.mxu0 0.0
    %136 = vmatprep.subr.mxu0 0.0
    %137 = vmatpush1.msra.mxu0 0.0
    %138 = vmatprep.subr.mxu0 0.0
    %139 = vmatpush1.msra.mxu0 0.0
    %140 = vmatprep.subr.mxu0 0.0
    %141 = vmatpush1.msra.mxu0 0.0
    %142 = vmatprep.subr.mxu0 0.0
    %143 = vmatpush1.msra.mxu0 0.0
    %144 = vmatprep.subr.mxu0 0.0
    %145 = vmatpush1.msra.mxu0 0.0
    %146 = vmatprep.subr.mxu0 0.0
    %147 = vmatpush1.msra.mxu0 0.0
    %148 = vmatprep.subr.mxu0 0.0
    %149 = vmatpush1.msra.mxu0 0.0
    %150 = vmatprep.subr.mxu0 0.0
    %151 = vmatpush1.msra.mxu0 0.0
    %152 = vmatprep.mubr.f32.mxu0 0.0
    %153 = vmatmul.mubr.f32.gmra.mrb[0].mxu0 %v66
    %v154 = vpop.f32.mrb[0].mxu0
    %v155 = vadd.f32 %v87, %v154
    %v156 = vpop.f32.mrb[0].mxu0
    %157 = vdwg.mxu0
    %v158 = vtanh.pop %v155
    %v159 = vmul.f32 %v158, 2.0
    %v160 = vmax.f32 %v155, 0.0
    %v161 = vand.u32 2147483647, %v155
    %v162 = vsub.f32 0.0, %v161
    %v163 = vmul.f32 %v162, 1.442695
    %v164 = vpow.pop %v163
    %v165 = vadd.f32 %v164, 1.0
    %v166 = vlog2.pop %v165
    %v167 = vmul.f32 %v166, 0.6931472
    %v168 = vmul.f32 -0.5, %v164
    %v169 = vadd.f32 %v168, 1.0
    %v170 = vmul.f32 %v169, %v164
    %v171 = vand.u32 2147483647, %v164
    %vm172 = vcmp.lt.f32.partialorder %v171, 0.0004427343
    %v173 = vsel %vm172, %v170, %v167
    %v174 = vadd.f32 %v160, %v173
    %v175 = vlaneseq
    %v176 = vand.u32 %v175, 127
    %vm177 = vcmp.lt.s32.totalorder %v176, 1
    %vm178 = vcmp.lt.s32.totalorder %v176, 2
    %v179 = vsel %vm178, %v174, 0.0
    %v180 = vsel %vm177, %v159, %v179
    %181 = vst [vmem:[#allocation5] sm:$0xff] %v180
    // Predicated region
    $region14: #{tpu_custom_call.1} parent=1 // pred_check
      _
    $region15: #{tpu_custom_call.1} parent=1 // pred_check_branch
      %183 = sbr.rel (0) target = $region17
    $region16: #{tpu_custom_call.1} parent=1 // pred_region
      %s185 = ssub.s32 128, 128
      %186 = vsyncadd [#allocation4], %s185
      %s188 = sshll.u32 [#allocation5], 4
      %s189 = int_to_ptr.vmem [resolvable:$true] %s188
      %191 = dma.vmem_to_hbm [thread:$0]  %s189, 128, %s2, [#allocation4]
    $region17: #{tpu_custom_call.1} parent=1 // pred_fallthru
      _
    // Predicated region
    $region18: #{tpu_custom_call.1} parent=1 // pred_check
      _
    $region19: #{tpu_custom_call.1} parent=1 // pred_check_branch
      %193 = sbr.rel (0) target = $region21
    $region20: #{tpu_custom_call.1} parent=1 // pred_region
      %194 = dma.done [#allocation4], 128
    $region21: #{tpu_custom_call.1} parent=1 // pred_fallthru
      _
    %195 = vsyncpa [#allocation3], 1
    %196 = vsyncpa [#allocation4], 1

</llo_original>
